<compile_context>
chip_gen: v5e
topology: v5e:2x2
jax: 0.10.0
libtpu: 0.0.40
codegen_flags: <defaults>
</compile_context>

<pallas_src>
import jax
import jax.numpy as jnp
from jax import lax
from jax.experimental import pallas as pl
from jax.experimental.pallas import tpu as pltpu


def _round_up(x, m):
    return ((x + m - 1) // m) * m


# ---------------------------------------------------------------------------
# Kernels
# ---------------------------------------------------------------------------

def _resident_gather_kernel(ids_ref, table_ref, out_ref):
    """Table-resident gather.

    ids_ref:   (B_pad,) int32 in SMEM (scalar-prefetched)
    table_ref: (C, E)   full embedding table, resident in VMEM
    out_ref:   (TB, E)  output rows for batch tile pl.program_id(0)
    """
    tb = out_ref.shape[0]
    base = pl.program_id(0) * tb
    # Static unroll over the batch tile (TB is a trace-time constant, <=128).
    # Each iteration is a dynamic-row VMEM->VMEM copy; no MXU, no VALU work.
    for r in range(tb):
        out_ref[r, :] = table_ref[ids_ref[base + r], :]


def _hbm_gather_kernel(ids_ref, *refs):
    """Fallback for tables too large for VMEM: the BlockSpec index_maps already
    DMA'd the TB requested rows; just assemble the sublane-dense output tile.

    refs = TB gathered (1, E) row blocks, followed by the (TB, E) output block.
    """
    del ids_ref  # only consumed by the index_maps
    *row_refs, out_ref = refs
    for r, row_ref in enumerate(row_refs):
        out_ref[r, :] = row_ref[0, :]


# ---------------------------------------------------------------------------
# Wrapper
# ---------------------------------------------------------------------------

# Stay well under the 32 MiB default scoped VMEM (v6e/v7x); leaves headroom
# for the double-buffered output tiles.  (v7x physical VMEM is only 64 MiB.)
_VMEM_BUDGET_BYTES = 24 * 1024 * 1024
_MAX_TB = 128  # batch rows per grid step on the resident path


def label_embedder_forward(condition, embedding_table):
    """condition: (B,) integer ids; embedding_table: (C, E). Returns (B, E)."""
    B = condition.shape[0]
    C, E = embedding_table.shape
    dtype = embedding_table.dtype
    itemsize = embedding_table.dtype.itemsize

    # Clamp so a bad index can never address out of bounds (torch raises here).
    ids = jnp.clip(condition.astype(jnp.int32), 0, C - 1)

    # Decide whether the whole table (+ 2x double-buffered output tiles) fits
    # comfortably in scoped VMEM on every generation (v5e/v6e/v7x).
    table_bytes = C * E * itemsize
    table_resident = table_bytes + 2 * _MAX_TB * E * itemsize <= _VMEM_BUDGET_BYTES

    # Batch tile: a multiple of 8 (sublane-dense output block). For small B
    # this is a single grid step — no per-step pipeline overhead to amortize.
    tb_cap = _MAX_TB if table_resident else 16
    TB = _round_up(B, 8) if B <= tb_cap else tb_cap
    B_pad = _round_up(B, TB)
    n_tiles = B_pad // TB
    if B_pad != B:
        ids = jnp.pad(ids, (0, B_pad - B))  # pad with a valid row index (0)

    if table_resident:
        grid_spec = pltpu.PrefetchScalarGridSpec(
            num_scalar_prefetch=1,       # `ids` lands in SMEM
            grid=(n_tiles,),
            in_specs=[
                # Same block every step -> the table is DMA'd once and stays
                # resident in VMEM across the whole grid.
                pl.BlockSpec((C, E), lambda i, ids_s: (0, 0)),
            ],
            out_specs=pl.BlockSpec((TB, E), lambda i, ids_s: (i, 0)),
        )
        kernel = _resident_gather_kernel
        operands = (ids, embedding_table)
    else:
        # Data-dependent HBM gather, amortized: TB row fetches per grid step
        # (one (1,E) in_spec per row, all aliasing the same HBM table) and a
        # sublane-dense (TB,E) output block.  Pipelining depth on the row
        # fetches could additionally be raised via pipeline_mode=pl.Buffered(3).
        def _row_spec(r):
            return pl.BlockSpec(
                (1, E), lambda i, ids_s, r=r: (ids_s[i * TB + r], 0)
            )

        grid_spec = pltpu.PrefetchScalarGridSpec(
            num_scalar_prefetch=1,
            grid=(n_tiles,),
            in_specs=[_row_spec(r) for r in range(TB)],
            out_specs=pl.BlockSpec((TB, E), lambda i, ids_s: (i, 0)),
        )
        kernel = _hbm_gather_kernel
        operands = (ids,) + (embedding_table,) * TB

    out = pl.pallas_call(
        kernel,
        out_shape=jax.ShapeDtypeStruct((B_pad, E), dtype),
        grid_spec=grid_spec,
        compiler_params=pltpu.CompilerParams(
            # A single step for small B (don't shard tiny copies across the
            # two v7x TensorCores); multiple independent batch tiles may be
            # split across cores when the batch is actually large.
            dimension_semantics=(("parallel",) if n_tiles > 1 else ("arbitrary",)),
        ),
    )(*operands)

    return out[:B] if B_pad != B else out


if __name__ == "__main__":
    emb_dim = 32
    num_classes = 2
    batch = 8

    key = jax.random.PRNGKey(0)
    k_tab, k_cond = jax.random.split(key)

    # nn.Embedding default init: weight ~ N(0, 1)
    embedding_table = jax.random.normal(
        k_tab, (num_classes, emb_dim), dtype=jnp.float32
    )
    condition = jax.random.randint(k_cond, (batch,), 0, num_classes, dtype=jnp.int32)

    out = label_embedder_forward(condition, embedding_table)
    out = jax.block_until_ready(out)

    # Reference: plain JAX gather (== torch.nn.Embedding semantics).
    ref = embedding_table[condition]
    assert out.shape == (batch, emb_dim), out.shape
    assert out.dtype == embedding_table.dtype, out.dtype
    assert jnp.allclose(out, ref, atol=1e-6), "mismatch vs reference"

    print("KERNEL_OK")
</pallas_src>

<mosaic_0001>
module attributes {stable_mosaic.version = 11 : i64} {
  func.func @_resident_gather_kernel(%arg0: i32, %arg1: memref<8xi32, #tpu.memory_space<smem>>, %arg2: memref<2x32xf32, #tpu.memory_space<vmem>>, %arg3: memref<8x32xf32, #tpu.memory_space<vmem>>) attributes {dimension_semantics = [#tpu.dimension_semantics<arbitrary>], iteration_bounds = array<i64: 1>, scalar_prefetch = 1 : i64, scratch_operands = 0 : i64, tpu.core_type = #tpu.core_type<tc>, window_params = [{pipeline_mode = #tpu.pipeline_mode<synchronous>, transform_indices = @transform_0, window_bounds = array<i64: 2, 32>}, {transform_indices = @transform_1, window_bounds = array<i64: 8, 32>}]} {
    %c8_i32 = arith.constant 8 : i32
    %0 = arith.muli %arg0, %c8_i32 : i32
    %c0_i32 = arith.constant 0 : i32
    %1 = arith.addi %0, %c0_i32 : i32
    %2 = arith.index_cast %1 : i32 to index
    %3 = memref.load %arg1[%2] : memref<8xi32, #tpu.memory_space<smem>>
    %4 = arith.index_cast %3 : i32 to index
    %c0 = arith.constant 0 : index
    %5 = vector.load %arg2[%4, %c0] : memref<2x32xf32, #tpu.memory_space<vmem>>, vector<1x32xf32>
    %6 = vector.shape_cast %5 : vector<1x32xf32> to vector<32xf32>
    %c0_0 = arith.constant 0 : index
    %c0_1 = arith.constant 0 : index
    %7 = vector.load %arg3[%c0_0, %c0_1] : memref<8x32xf32, #tpu.memory_space<vmem>>, vector<1x32xf32>
    %8 = vector.shape_cast %7 : vector<1x32xf32> to vector<32xf32>
    %9 = vector.shape_cast %6 : vector<32xf32> to vector<1x32xf32>
    tpu.vector_store %arg3[%c0_0, %c0_1], %9 {strides = array<i32>} : memref<8x32xf32, #tpu.memory_space<vmem>>, vector<1x32xf32>,
    %c1_i32 = arith.constant 1 : i32
    %10 = arith.addi %0, %c1_i32 : i32
    %11 = arith.index_cast %10 : i32 to index
    %12 = memref.load %arg1[%11] : memref<8xi32, #tpu.memory_space<smem>>
    %13 = arith.index_cast %12 : i32 to index
    %c0_2 = arith.constant 0 : index
    %14 = vector.load %arg2[%13, %c0_2] : memref<2x32xf32, #tpu.memory_space<vmem>>, vector<1x32xf32>
    %15 = vector.shape_cast %14 : vector<1x32xf32> to vector<32xf32>
    %c1 = arith.constant 1 : index
    %c0_3 = arith.constant 0 : index
    %16 = vector.load %arg3[%c1, %c0_3] : memref<8x32xf32, #tpu.memory_space<vmem>>, vector<1x32xf32>
    %17 = vector.shape_cast %16 : vector<1x32xf32> to vector<32xf32>
    %18 = vector.shape_cast %15 : vector<32xf32> to vector<1x32xf32>
    tpu.vector_store %arg3[%c1, %c0_3], %18 {strides = array<i32>} : memref<8x32xf32, #tpu.memory_space<vmem>>, vector<1x32xf32>,
    %c2_i32 = arith.constant 2 : i32
    %19 = arith.addi %0, %c2_i32 : i32
    %20 = arith.index_cast %19 : i32 to index
    %21 = memref.load %arg1[%20] : memref<8xi32, #tpu.memory_space<smem>>
    %22 = arith.index_cast %21 : i32 to index
    %c0_4 = arith.constant 0 : index
    %23 = vector.load %arg2[%22, %c0_4] : memref<2x32xf32, #tpu.memory_space<vmem>>, vector<1x32xf32>
    %24 = vector.shape_cast %23 : vector<1x32xf32> to vector<32xf32>
    %c2 = arith.constant 2 : index
    %c0_5 = arith.constant 0 : index
    %25 = vector.load %arg3[%c2, %c0_5] : memref<8x32xf32, #tpu.memory_space<vmem>>, vector<1x32xf32>
    %26 = vector.shape_cast %25 : vector<1x32xf32> to vector<32xf32>
    %27 = vector.shape_cast %24 : vector<32xf32> to vector<1x32xf32>
    tpu.vector_store %arg3[%c2, %c0_5], %27 {strides = array<i32>} : memref<8x32xf32, #tpu.memory_space<vmem>>, vector<1x32xf32>,
    %c3_i32 = arith.constant 3 : i32
    %28 = arith.addi %0, %c3_i32 : i32
    %29 = arith.index_cast %28 : i32 to index
    %30 = memref.load %arg1[%29] : memref<8xi32, #tpu.memory_space<smem>>
    %31 = arith.index_cast %30 : i32 to index
    %c0_6 = arith.constant 0 : index
    %32 = vector.load %arg2[%31, %c0_6] : memref<2x32xf32, #tpu.memory_space<vmem>>, vector<1x32xf32>
    %33 = vector.shape_cast %32 : vector<1x32xf32> to vector<32xf32>
    %c3 = arith.constant 3 : index
    %c0_7 = arith.constant 0 : index
    %34 = vector.load %arg3[%c3, %c0_7] : memref<8x32xf32, #tpu.memory_space<vmem>>, vector<1x32xf32>
    %35 = vector.shape_cast %34 : vector<1x32xf32> to vector<32xf32>
    %36 = vector.shape_cast %33 : vector<32xf32> to vector<1x32xf32>
    tpu.vector_store %arg3[%c3, %c0_7], %36 {strides = array<i32>} : memref<8x32xf32, #tpu.memory_space<vmem>>, vector<1x32xf32>,
    %c4_i32 = arith.constant 4 : i32
    %37 = arith.addi %0, %c4_i32 : i32
    %38 = arith.index_cast %37 : i32 to index
    %39 = memref.load %arg1[%38] : memref<8xi32, #tpu.memory_space<smem>>
    %40 = arith.index_cast %39 : i32 to index
    %c0_8 = arith.constant 0 : index
    %41 = vector.load %arg2[%40, %c0_8] : memref<2x32xf32, #tpu.memory_space<vmem>>, vector<1x32xf32>
    %42 = vector.shape_cast %41 : vector<1x32xf32> to vector<32xf32>
    %c4 = arith.constant 4 : index
    %c0_9 = arith.constant 0 : index
    %43 = vector.load %arg3[%c4, %c0_9] : memref<8x32xf32, #tpu.memory_space<vmem>>, vector<1x32xf32>
    %44 = vector.shape_cast %43 : vector<1x32xf32> to vector<32xf32>
    %45 = vector.shape_cast %42 : vector<32xf32> to vector<1x32xf32>
    tpu.vector_store %arg3[%c4, %c0_9], %45 {strides = array<i32>} : memref<8x32xf32, #tpu.memory_space<vmem>>, vector<1x32xf32>,
    %c5_i32 = arith.constant 5 : i32
    %46 = arith.addi %0, %c5_i32 : i32
    %47 = arith.index_cast %46 : i32 to index
    %48 = memref.load %arg1[%47] : memref<8xi32, #tpu.memory_space<smem>>
    %49 = arith.index_cast %48 : i32 to index
    %c0_10 = arith.constant 0 : index
    %50 = vector.load %arg2[%49, %c0_10] : memref<2x32xf32, #tpu.memory_space<vmem>>, vector<1x32xf32>
    %51 = vector.shape_cast %50 : vector<1x32xf32> to vector<32xf32>
    %c5 = arith.constant 5 : index
    %c0_11 = arith.constant 0 : index
    %52 = vector.load %arg3[%c5, %c0_11] : memref<8x32xf32, #tpu.memory_space<vmem>>, vector<1x32xf32>
    %53 = vector.shape_cast %52 : vector<1x32xf32> to vector<32xf32>
    %54 = vector.shape_cast %51 : vector<32xf32> to vector<1x32xf32>
    tpu.vector_store %arg3[%c5, %c0_11], %54 {strides = array<i32>} : memref<8x32xf32, #tpu.memory_space<vmem>>, vector<1x32xf32>,
    %c6_i32 = arith.constant 6 : i32
    %55 = arith.addi %0, %c6_i32 : i32
    %56 = arith.index_cast %55 : i32 to index
    %57 = memref.load %arg1[%56] : memref<8xi32, #tpu.memory_space<smem>>
    %58 = arith.index_cast %57 : i32 to index
    %c0_12 = arith.constant 0 : index
    %59 = vector.load %arg2[%58, %c0_12] : memref<2x32xf32, #tpu.memory_space<vmem>>, vector<1x32xf32>
    %60 = vector.shape_cast %59 : vector<1x32xf32> to vector<32xf32>
    %c6 = arith.constant 6 : index
    %c0_13 = arith.constant 0 : index
    %61 = vector.load %arg3[%c6, %c0_13] : memref<8x32xf32, #tpu.memory_space<vmem>>, vector<1x32xf32>
    %62 = vector.shape_cast %61 : vector<1x32xf32> to vector<32xf32>
    %63 = vector.shape_cast %60 : vector<32xf32> to vector<1x32xf32>
    tpu.vector_store %arg3[%c6, %c0_13], %63 {strides = array<i32>} : memref<8x32xf32, #tpu.memory_space<vmem>>, vector<1x32xf32>,
    %c7_i32 = arith.constant 7 : i32
    %64 = arith.addi %0, %c7_i32 : i32
    %65 = arith.index_cast %64 : i32 to index
    %66 = memref.load %arg1[%65] : memref<8xi32, #tpu.memory_space<smem>>
    %67 = arith.index_cast %66 : i32 to index
    %c0_14 = arith.constant 0 : index
    %68 = vector.load %arg2[%67, %c0_14] : memref<2x32xf32, #tpu.memory_space<vmem>>, vector<1x32xf32>
    %69 = vector.shape_cast %68 : vector<1x32xf32> to vector<32xf32>
    %c7 = arith.constant 7 : index
    %c0_15 = arith.constant 0 : index
    %70 = vector.load %arg3[%c7, %c0_15] : memref<8x32xf32, #tpu.memory_space<vmem>>, vector<1x32xf32>
    %71 = vector.shape_cast %70 : vector<1x32xf32> to vector<32xf32>
    %72 = vector.shape_cast %69 : vector<32xf32> to vector<1x32xf32>
    tpu.vector_store %arg3[%c7, %c0_15], %72 {strides = array<i32>} : memref<8x32xf32, #tpu.memory_space<vmem>>, vector<1x32xf32>,
    return
  }
  func.func @transform_0(%arg0: i32, %arg1: memref<8xi32, #tpu.memory_space<smem>>) -> (i32, i32) {
    %c0_i32 = arith.constant 0 : i32
    %c0_i32_0 = arith.constant 0 : i32
    %c0_i32_1 = arith.constant 0 : i32
    return %c0_i32, %c0_i32_0 : i32, i32
  }
  func.func @transform_1(%arg0: i32, %arg1: memref<8xi32, #tpu.memory_space<smem>>) -> (i32, i32) {
    %c0_i32 = arith.constant 0 : i32
    %c0_i32_0 = arith.constant 0 : i32
    return %arg0, %c0_i32 : i32, i32
  }
}

</mosaic_0001>

<llo_original>
// kernel: tpu_custom_call.1
$region0: #{tpu_custom_call.1}
  #allocation0 [shape = 'u32[]', space=smem, size = 0x4, offset = 0x4, fixed_abs, tag = 'smem constant byte address 0x4 - core index']
  #allocation1 [shape = 'u32[72,128]{1,0:T(1,128)}', space=vmem, size = 0x9000, scoped, tag = 'internal scratch']
  #allocation2 [shape = 's32[1]{0}', space=sflag, size = 0x4, scoped, tag = 'scoped memory for tpu_custom_call.1']
  #allocation3 [shape = 'u8[512]{0}', space=smem, size = 0x200, scoped, tag = 'prefetched SMEM operand 0']
  %s0 = inlined_call_operand.hbm [shape: s32[8], index: 0, kind: input, shape index: {}]
  %s1 = inlined_call_operand.hbm [shape: f32[2,32], index: 1, kind: input, shape index: {}]
  %s2 = inlined_call_operand.hbm [shape: f32[8,32], index: 2, kind: output, shape index: {}]
  %s3 = sld [smem:[#allocation0]]
  $region18: #{tpu_custom_call.1} parent=0
    _
  %s5 = ssub.s32 1, %s3
  %s6 = scalar_select 0, %s5, %s3
  %s8 = sshll.u32 %s0, 4
  %s9 = int_to_ptr.hbm [resolvable:$true] %s8
  %11 = dma.hbm_to_smem %s9, 16, [#allocation3], [#allocation2]
  %13 = dma.done [#allocation2], 16
  %14 = sfence
  $region1: #{tpu_custom_call.1} parent=0
    #allocation4 [shape = 'u8[1024]{0}', space=vmem, size = 0x400, scoped, tag = 'input window, operand 1, single buffered']
    #allocation5 [shape = 's32[1]{0}', space=sflag, size = 0x4, scoped, tag = 'scoped memory for tpu_custom_call.1']
    #allocation6 [shape = 's32[1]{0}', space=sflag, size = 0x4, scoped, tag = 'scoped memory for tpu_custom_call.1']
    #allocation7 [shape = 'u8[4096]{0}', space=vmem, size = 0x1000, scoped, tag = 'output window, operand 0, single buffered']
    %15 = vsyncpa [#allocation5], 0
    %16 = vsyncpa [#allocation6], 0
    // Predicated region
    $region2: #{tpu_custom_call.1} parent=1 // pred_check
      _
    $region3: #{tpu_custom_call.1} parent=1 // pred_check_branch
      %18 = sbr.rel (0) target = $region5
    $region4: #{tpu_custom_call.1} parent=1 // pred_region
      %20 = vsyncadd [#allocation5], 0
      %s22 = sshll.u32 %s1, 4
      %s23 = int_to_ptr.hbm [resolvable:$true] %s22
      %s24 = sshll.u32 [#allocation4], 4
      %s25 = int_to_ptr.vmem [resolvable:$true] %s24
      %27 = dma.hbm_to_vmem [thread:$0]  %s23, 32, %s25, [#allocation5]
    $region5: #{tpu_custom_call.1} parent=1 // pred_fallthru
      _
    // Predicated region
    $region6: #{tpu_custom_call.1} parent=1 // pred_check
      _
    $region7: #{tpu_custom_call.1} parent=1 // pred_check_branch
      %29 = sbr.rel (0) target = $region9
    $region8: #{tpu_custom_call.1} parent=1 // pred_region
      %31 = dma.done [#allocation5], 32
    $region9: #{tpu_custom_call.1} parent=1 // pred_fallthru
      _
    %s32 = smul.u32 0, 8
    %s33 = sld [smem:[#allocation3 + %s32]]
    %s34 = scalar_lea.vmem [#allocation4], %s33
    %v35 = vld [vmem:[%s34] sm:$0x1]
    %vm36 = vcmask 253952
    %37 = vst.msk [vmem:[#allocation7] sm:$0x1] %vm36, %v35
    %s38 = sadd.s32 %s32, 1
    %s39 = sld [smem:[#allocation3 + %s38]]
    %s40 = scalar_lea.vmem [#allocation4], %s39
    %v41 = vld [vmem:[%s40] sm:$0x1]
    %42 = vst.msk [vmem:[#allocation7 + $0x1] sm:$0x1] %vm36, %v41
    %s43 = sadd.s32 %s32, 2
    %s44 = sld [smem:[#allocation3 + %s43]]
    %s45 = scalar_lea.vmem [#allocation4], %s44
    %v46 = vld [vmem:[%s45] sm:$0x1]
    %47 = vst.msk [vmem:[#allocation7 + $0x2] sm:$0x1] %vm36, %v46
    %s48 = sadd.s32 %s32, 3
    %s49 = sld [smem:[#allocation3 + %s48]]
    %s50 = scalar_lea.vmem [#allocation4], %s49
    %v51 = vld [vmem:[%s50] sm:$0x1]
    %52 = vst.msk [vmem:[#allocation7 + $0x3] sm:$0x1] %vm36, %v51
    %s53 = sadd.s32 %s32, 4
    %s54 = sld [smem:[#allocation3 + %s53]]
    %s55 = scalar_lea.vmem [#allocation4], %s54
    %v56 = vld [vmem:[%s55] sm:$0x1]
    %57 = vst.msk [vmem:[#allocation7 + $0x4] sm:$0x1] %vm36, %v56
    %s58 = sadd.s32 %s32, 5
    %s59 = sld [smem:[#allocation3 + %s58]]
    %s60 = scalar_lea.vmem [#allocation4], %s59
    %v61 = vld [vmem:[%s60] sm:$0x1]
    %62 = vst.msk [vmem:[#allocation7 + $0x5] sm:$0x1] %vm36, %v61
    %s63 = sadd.s32 %s32, 6
    %s64 = sld [smem:[#allocation3 + %s63]]
    %s65 = scalar_lea.vmem [#allocation4], %s64
    %v66 = vld [vmem:[%s65] sm:$0x1]
    %67 = vst.msk [vmem:[#allocation7 + $0x6] sm:$0x1] %vm36, %v66
    %s68 = sadd.s32 %s32, 7
    %s69 = sld [smem:[#allocation3 + %s68]]
    %s70 = scalar_lea.vmem [#allocation4], %s69
    %v71 = vld [vmem:[%s70] sm:$0x1]
    %72 = vst.msk [vmem:[#allocation7 + $0x7] sm:$0x1] %vm36, %v71
    // Predicated region
    $region10: #{tpu_custom_call.1} parent=1 // pred_check
      _
    $region11: #{tpu_custom_call.1} parent=1 // pred_check_branch
      %74 = sbr.rel (0) target = $region13
    $region12: #{tpu_custom_call.1} parent=1 // pred_region
      %76 = vsyncadd [#allocation6], 0
      %s78 = sshll.u32 [#allocation7], 4
      %s79 = int_to_ptr.vmem [resolvable:$true] %s78
      %s80 = sshll.u32 %s2, 4
      %s81 = int_to_ptr.hbm [resolvable:$true] %s80
      %83 = dma.vmem_to_hbm [thread:$0]  %s79, 128, %s81, [#allocation6]
    $region13: #{tpu_custom_call.1} parent=1 // pred_fallthru
      _
    // Predicated region
    $region14: #{tpu_custom_call.1} parent=1 // pred_check
      _
    $region15: #{tpu_custom_call.1} parent=1 // pred_check_branch
      %85 = sbr.rel (0) target = $region17
    $region16: #{tpu_custom_call.1} parent=1 // pred_region
      %87 = dma.done [#allocation6], 128
    $region17: #{tpu_custom_call.1} parent=1 // pred_fallthru
      _
    %88 = vsyncpa [#allocation5], 1
    %89 = vsyncpa [#allocation6], 1

</llo_original>
